<compile_context>
chip_gen: v5e
topology: v5e:2x2
jax: 0.10.0
libtpu: 0.0.40
codegen_flags: <defaults>
</compile_context>

<pallas_src>
import functools

import jax
import jax.numpy as jnp
from jax.experimental import pallas as pl
from jax.experimental.pallas import tpu as pltpu

LANE = 128      # lanes per vreg row
ACC_ROWS = 32   # accumulator sublane rows (also satisfies bf16/int8 packing minima)


def _cdiv(a, b):
    return -(-a // b)


def _round_up(a, b):
    return _cdiv(a, b) * b


def _bexpmsae_kernel(yp_ref, yt_ref, out_ref, acc_ref, *,
                     a, b, mse_w, mae_w, inv_n,
                     tile_rows, tiles_per_core, rows_total, needs_mask):
    i = pl.program_id(1)

    @pl.when(i == 0)
    def _():
        acc_ref[...] = jnp.zeros_like(acc_ref)

    yp = yp_ref[...].astype(jnp.float32)
    yt = yt_ref[...].astype(jnp.float32)

    # weight = exp(a * y_true) - b   (EUP slot; free relative to VPU/DMA)
    w = jnp.exp(yt * a) - b
    ad = jnp.abs(yp - yt)
    # mse_w * d^2 * w + mae_w * |d| * w == (mse_w * |d| + mae_w) * |d| * w
    term = (mse_w * ad + mae_w) * ad * w

    def fold(t):
        # Leading-dim-only reshape (last dim stays 128-aligned): free.  Short
        # VPU-add tree into the (32, 128) vreg-resident accumulator.
        return jnp.sum(t.reshape(tile_rows // ACC_ROWS, ACC_ROWS, LANE), axis=0)

    if needs_mask:
        # Only tiles that overrun the real array pay the iota/compare/select.
        tile_start = (pl.program_id(0) * tiles_per_core + i) * tile_rows
        in_range = tile_start + tile_rows <= rows_total

        @pl.when(in_range)
        def _():
            acc_ref[...] += fold(term)

        @pl.when(jnp.logical_not(in_range))
        def _():
            row = jax.lax.broadcasted_iota(jnp.int32, term.shape, 0) + tile_start
            acc_ref[...] += fold(jnp.where(row < rows_total, term, 0.0))
    else:
        acc_ref[...] += fold(term)

    @pl.when(i == pl.num_programs(1) - 1)
    def _():
        out_ref[...] = jnp.sum(acc_ref[...], axis=(0, 1), keepdims=True) * inv_n


def bexpmsae_loss(y_pre, y_true, a=6.0, b=0.8, mse_w=1.0, mae_w=1.0,
                  tile_rows=8192):
    """Pallas TPU implementation of BEXPMSAELoss.forward (4D or 5D inputs).

    tile_rows: rows of 128 lanes per grid step (rounded to a multiple of 32).
    The default 8192 moves 4 MiB per f32 input block (16 MiB double-buffered);
    the scoped VMEM limit is raised accordingly, so it is safe on v5e/v6e
    (128 MiB physical) and v7x (64 MiB physical).  Feeding bf16 inputs halves
    HBM traffic (the f32 upcast happens on-chip).
    """
    assert y_pre.shape == y_true.shape
    n_elems = int(y_pre.size)
    itemsize = jnp.dtype(y_pre.dtype).itemsize

    # Flatten is a free metadata reshape for contiguous arrays; keep native dtype.
    yp = y_pre.reshape(-1)
    yt = y_true.reshape(-1)

    rem = n_elems % LANE
    if rem:
        # TODO(synk): this rare (<128-element remainder) fallback materializes a
        # padded copy of both tensors (extra HBM traffic); the padded elements
        # contribute exactly 0 (d == 0), so no extra in-kernel mask is needed.
        pad = LANE - rem
        yp = jnp.pad(yp, (0, pad))
        yt = jnp.pad(yt, (0, pad))

    rows_total = yp.shape[0] // LANE
    yp2 = yp.reshape(rows_total, LANE)
    yt2 = yt.reshape(rows_total, LANE)

    # Tile sizing: multiples of 32 sublanes (valid packing floor for f32/bf16/int8),
    # capped to the problem size.
    tr = max(ACC_ROWS, (int(tile_rows) // ACC_ROWS) * ACC_ROWS)
    tr = min(tr, _round_up(rows_total, ACC_ROWS))

    n_tiles = _cdiv(rows_total, tr)
    # 2-way "parallel" split feeds both TensorCores on v7x; on 1-TC chips it just
    # iterates.  Only split when each core gets at least one real tile.
    num_cores = 2 if n_tiles >= 2 else 1
    tiles_per_core = _cdiv(n_tiles, num_cores)
    virtual_tiles = num_cores * tiles_per_core
    needs_mask = (virtual_tiles * tr) != rows_total

    if virtual_tiles > n_tiles:
        # Core 1's trailing virtual tile re-reads the last real tile; its
        # contribution is masked to zero in-kernel.
        def in_map(c, i):
            return (jnp.minimum(c * tiles_per_core + i, n_tiles - 1), 0)
    else:
        def in_map(c, i):
            return (c * tiles_per_core + i, 0)

    kern = functools.partial(
        _bexpmsae_kernel,
        a=float(a), b=float(b), mse_w=float(mse_w), mae_w=float(mae_w),
        inv_n=1.0 / float(n_elems),
        tile_rows=tr, tiles_per_core=tiles_per_core,
        rows_total=rows_total, needs_mask=needs_mask)

    block_bytes = tr * LANE * itemsize
    # 2 inputs x 2 pipeline buffers + slack; >= 32 MiB so the default 8192-row
    # f32 tiles clear v5e's 16 MiB default scoped-VMEM ceiling.
    vmem_limit = max(32 * 1024 * 1024, 4 * block_bytes + (4 << 20))

    cost = pl.CostEstimate(
        flops=10 * n_elems,
        transcendentals=n_elems,
        bytes_accessed=int(2 * n_elems * itemsize))

    out = pl.pallas_call(
        kern,
        out_shape=jax.ShapeDtypeStruct((num_cores, 1), jnp.float32),
        grid_spec=pltpu.PrefetchScalarGridSpec(
            num_scalar_prefetch=0,
            grid=(num_cores, tiles_per_core),
            in_specs=[
                pl.BlockSpec((tr, LANE), in_map),
                pl.BlockSpec((tr, LANE), in_map),
            ],
            out_specs=pl.BlockSpec((1, 1), lambda c, i: (c, 0)),
            scratch_shapes=[pltpu.VMEM((ACC_ROWS, LANE), jnp.float32)],
        ),
        compiler_params=pltpu.CompilerParams(
            dimension_semantics=("parallel", "arbitrary"),
            vmem_limit_bytes=int(vmem_limit)),
        cost_estimate=cost,
    )(yp2, yt2)

    # Per-core partials already carry the 1/N factor; just add them.
    return jnp.sum(out)


def bexpmsae_loss_ref(y_pre, y_true, a=6.0, b=0.8, mse_w=1.0, mae_w=1.0):
    """Pure-JAX reference, mirrors the PyTorch forward exactly."""
    y_pre = y_pre.astype(jnp.float32)
    y_true = y_true.astype(jnp.float32)
    weight = jnp.exp(y_true * a) - b
    loss_mse = jnp.mean((y_pre - y_true) ** 2 * weight)
    loss_mae = jnp.mean(jnp.abs(y_pre - y_true) * weight)
    return loss_mse * mse_w + loss_mae * mae_w


if __name__ == "__main__":
    key = jax.random.PRNGKey(0)
    k1, k2 = jax.random.split(key)

    # Module hyper-parameters (from __init__ defaults).
    a, b, mse_w, mae_w = 6.0, 0.8, 1.0, 1.0

    # Small NCHW tensors; y_true must lie in [0, 1] (the module asserts this).
    shape = (2, 4, 16, 16)                         # 2048 elems = 16 lane-rows
    y_true = jax.random.uniform(k1, shape, dtype=jnp.float32)
    y_pre = jax.random.uniform(k2, shape, dtype=jnp.float32)

    loss = jax.block_until_ready(
        bexpmsae_loss(y_pre, y_true, a=a, b=b, mse_w=mse_w, mae_w=mae_w))
    ref = bexpmsae_loss_ref(y_pre, y_true, a=a, b=b, mse_w=mse_w, mae_w=mae_w)
    assert jnp.allclose(loss, ref, rtol=1e-5, atol=1e-6), (loss, ref)

    # 2-core split + partial last tile: 5120 elems = 40 rows with tile_rows=32
    # -> grid (2, 1); core 1's tile overruns the array and is masked in-kernel.
    shape2 = (4, 4, 16, 20)
    yt2 = jax.random.uniform(k1, shape2, dtype=jnp.float32)
    yp2 = jax.random.uniform(k2, shape2, dtype=jnp.float32)
    loss2 = jax.block_until_ready(
        bexpmsae_loss(yp2, yt2, a=a, b=b, mse_w=mse_w, mae_w=mae_w, tile_rows=32))
    ref2 = bexpmsae_loss_ref(yp2, yt2, a=a, b=b, mse_w=mse_w, mae_w=mae_w)
    assert jnp.allclose(loss2, ref2, rtol=1e-5, atol=1e-6), (loss2, ref2)

    # Odd tile count across the 2-way split (clamped virtual tile): 96 rows with
    # tile_rows=32 -> 3 real tiles over grid (2, 2).
    shape3 = (3, 4, 32, 32)
    yt3 = jax.random.uniform(k1, shape3, dtype=jnp.float32)
    yp3 = jax.random.uniform(k2, shape3, dtype=jnp.float32)
    loss3 = jax.block_until_ready(
        bexpmsae_loss(yp3, yt3, a=a, b=b, mse_w=mse_w, mae_w=mae_w, tile_rows=32))
    ref3 = bexpmsae_loss_ref(yp3, yt3, a=a, b=b, mse_w=mse_w, mae_w=mae_w)
    assert jnp.allclose(loss3, ref3, rtol=1e-5, atol=1e-6), (loss3, ref3)

    # Element count not a multiple of 128 (rare pad fallback), 5D input.
    shape4 = (2, 3, 1, 7, 11)                      # 462 elems
    yt4 = jax.random.uniform(k1, shape4, dtype=jnp.float32)
    yp4 = jax.random.uniform(k2, shape4, dtype=jnp.float32)
    loss4 = jax.block_until_ready(
        bexpmsae_loss(yp4, yt4, a=a, b=b, mse_w=mse_w, mae_w=mae_w))
    ref4 = bexpmsae_loss_ref(yp4, yt4, a=a, b=b, mse_w=mse_w, mae_w=mae_w)
    assert jnp.allclose(loss4, ref4, rtol=1e-5, atol=1e-6), (loss4, ref4)

    print("KERNEL_OK")
</pallas_src>

<mosaic_0001>
module attributes {stable_mosaic.version = 11 : i64} {
  func.func @_bexpmsae_kernel(%arg0: i32, %arg1: i32, %arg2: memref<32x128xf32, #tpu.memory_space<vmem>>, %arg3: memref<32x128xf32, #tpu.memory_space<vmem>>, %arg4: memref<1x1xf32, #tpu.memory_space<vmem>>, %arg5: memref<32x128xf32, #tpu.memory_space<vmem>>) attributes {dimension_semantics = [#tpu.dimension_semantics<parallel>, #tpu.dimension_semantics<arbitrary>], iteration_bounds = array<i64: 1, 1>, scalar_prefetch = 0 : i64, scratch_operands = 1 : i64, tpu.core_type = #tpu.core_type<tc>, window_params = [{transform_indices = @transform_0, window_bounds = array<i64: 32, 128>}, {transform_indices = @transform_1, window_bounds = array<i64: 32, 128>}, {transform_indices = @transform_2, window_bounds = array<i64: 1, 1>}]} {
    %c0_i32 = arith.constant 0 : i32
    %0 = arith.cmpi eq, %arg1, %c0_i32 : i32
    %1 = arith.extui %0 : i1 to i32
    %c0_i32_0 = arith.constant 0 : i32
    %2 = arith.cmpi ne, %1, %c0_i32_0 : i32
    scf.if %2 {
      %cst_12 = arith.constant 0.000000e+00 : f32
      %31 = vector.broadcast %cst_12 : f32 to vector<32x128xf32>
      %c0_13 = arith.constant 0 : index
      %c0_14 = arith.constant 0 : index
      %32 = vector.load %arg5[%c0_13, %c0_14] : memref<32x128xf32, #tpu.memory_space<vmem>>, vector<32x128xf32>
      tpu.vector_store %arg5[%c0_13, %c0_14], %31 {strides = array<i32>} : memref<32x128xf32, #tpu.memory_space<vmem>>, vector<32x128xf32>,
    } else {
    }
    %c0 = arith.constant 0 : index
    %c0_1 = arith.constant 0 : index
    %3 = vector.load %arg2[%c0, %c0_1] : memref<32x128xf32, #tpu.memory_space<vmem>>, vector<32x128xf32>
    %c0_2 = arith.constant 0 : index
    %c0_3 = arith.constant 0 : index
    %4 = vector.load %arg3[%c0_2, %c0_3] : memref<32x128xf32, #tpu.memory_space<vmem>>, vector<32x128xf32>
    %cst = arith.constant 6.000000e+00 : f32
    %5 = vector.broadcast %cst : f32 to vector<32x128xf32>
    %6 = arith.mulf %4, %5 : vector<32x128xf32>
    %7 = math.exp %6 : vector<32x128xf32>
    %cst_4 = arith.constant 8.000000e-01 : f32
    %8 = vector.broadcast %cst_4 : f32 to vector<32x128xf32>
    %9 = arith.subf %7, %8 : vector<32x128xf32>
    %10 = arith.subf %3, %4 : vector<32x128xf32>
    %11 = math.absf %10 : vector<32x128xf32>
    %cst_5 = arith.constant 1.000000e+00 : f32
    %12 = vector.broadcast %cst_5 : f32 to vector<32x128xf32>
    %13 = arith.mulf %12, %11 : vector<32x128xf32>
    %cst_6 = arith.constant 1.000000e+00 : f32
    %14 = vector.broadcast %cst_6 : f32 to vector<32x128xf32>
    %15 = arith.addf %13, %14 : vector<32x128xf32>
    %16 = arith.mulf %15, %11 : vector<32x128xf32>
    %17 = arith.mulf %16, %9 : vector<32x128xf32>
    %c1_i32 = arith.constant 1 : i32
    %18 = arith.muli %arg0, %c1_i32 : i32
    %19 = arith.addi %18, %arg1 : i32
    %c32_i32 = arith.constant 32 : i32
    %20 = arith.muli %19, %c32_i32 : i32
    %c32_i32_7 = arith.constant 32 : i32
    %21 = arith.addi %20, %c32_i32_7 : i32
    %c16_i32 = arith.constant 16 : i32
    %22 = arith.cmpi sle, %21, %c16_i32 : i32
    %23 = arith.extui %22 : i1 to i32
    %c0_i32_8 = arith.constant 0 : i32
    %24 = arith.cmpi ne, %23, %c0_i32_8 : i32
    scf.if %24 {
      %c0_12 = arith.constant 0 : index
      %c0_13 = arith.constant 0 : index
      %31 = vector.load %arg5[%c0_12, %c0_13] : memref<32x128xf32, #tpu.memory_space<vmem>>, vector<32x128xf32>
      %32 = vector.shape_cast %17 : vector<32x128xf32> to vector<1x32x128xf32>
      %cst_14 = arith.constant dense<0.000000e+00> : vector<32x128xf32>
      %33 = vector.multi_reduction <add>, %32, %cst_14 [0] : vector<1x32x128xf32> to vector<32x128xf32>
      %34 = arith.addf %31, %33 : vector<32x128xf32>
      %c0_15 = arith.constant 0 : index
      %c0_16 = arith.constant 0 : index
      %35 = vector.load %arg5[%c0_15, %c0_16] : memref<32x128xf32, #tpu.memory_space<vmem>>, vector<32x128xf32>
      tpu.vector_store %arg5[%c0_15, %c0_16], %34 {strides = array<i32>} : memref<32x128xf32, #tpu.memory_space<vmem>>, vector<32x128xf32>,
    } else {
    }
    %true = arith.constant true
    %25 = arith.xori %22, %true : i1
    %26 = arith.extui %25 : i1 to i32
    %c0_i32_9 = arith.constant 0 : i32
    %27 = arith.cmpi ne, %26, %c0_i32_9 : i32
    scf.if %27 {
      %31 = tpu.iota {dimensions = array<i32: 0>} : vector<32x128xi32>
      %32 = vector.broadcast %20 : i32 to vector<32x128xi32>
      %33 = arith.addi %31, %32 : vector<32x128xi32>
      %c0_12 = arith.constant 0 : index
      %c0_13 = arith.constant 0 : index
      %34 = vector.load %arg5[%c0_12, %c0_13] : memref<32x128xf32, #tpu.memory_space<vmem>>, vector<32x128xf32>
      %c16_i32_14 = arith.constant 16 : i32
      %35 = vector.broadcast %c16_i32_14 : i32 to vector<32x128xi32>
      %36 = arith.cmpi slt, %33, %35 : vector<32x128xi32>
      %cst_15 = arith.constant 0.000000e+00 : f32
      %37 = vector.broadcast %cst_15 : f32 to vector<32x128xf32>
      %38 = arith.select %36, %17, %37 : vector<32x128xi1>, vector<32x128xf32>
      %39 = vector.shape_cast %38 : vector<32x128xf32> to vector<1x32x128xf32>
      %cst_16 = arith.constant dense<0.000000e+00> : vector<32x128xf32>
      %40 = vector.multi_reduction <add>, %39, %cst_16 [0] : vector<1x32x128xf32> to vector<32x128xf32>
      %41 = arith.addf %34, %40 : vector<32x128xf32>
      %c0_17 = arith.constant 0 : index
      %c0_18 = arith.constant 0 : index
      %42 = vector.load %arg5[%c0_17, %c0_18] : memref<32x128xf32, #tpu.memory_space<vmem>>, vector<32x128xf32>
      tpu.vector_store %arg5[%c0_17, %c0_18], %41 {strides = array<i32>} : memref<32x128xf32, #tpu.memory_space<vmem>>, vector<32x128xf32>,
    } else {
    }
    %c0_i32_10 = arith.constant 0 : i32
    %28 = arith.cmpi eq, %arg1, %c0_i32_10 : i32
    %29 = arith.extui %28 : i1 to i32
    %c0_i32_11 = arith.constant 0 : i32
    %30 = arith.cmpi ne, %29, %c0_i32_11 : i32
    scf.if %30 {
      %c0_12 = arith.constant 0 : index
      %c0_13 = arith.constant 0 : index
      %31 = vector.load %arg5[%c0_12, %c0_13] : memref<32x128xf32, #tpu.memory_space<vmem>>, vector<32x128xf32>
      %32 = vector.shape_cast %31 : vector<32x128xf32> to vector<1x32x128xf32>
      %cst_14 = arith.constant dense<0.000000e+00> : vector<1xf32>
      %33 = vector.multi_reduction <add>, %32, %cst_14 [1, 2] : vector<1x32x128xf32> to vector<1xf32>
      %34 = vector.shape_cast %33 : vector<1xf32> to vector<1x1x1xf32>
      %35 = vector.extract %34[0, 0, 0] : f32 from vector<1x1x1xf32>
      %36 = vector.broadcast %35 : f32 to vector<1x1xf32>
      %cst_15 = arith.constant 4.8828125E-4 : f32
      %37 = vector.broadcast %cst_15 : f32 to vector<1x1xf32>
      %38 = arith.mulf %36, %37 : vector<1x1xf32>
      %c0_16 = arith.constant 0 : index
      %c0_17 = arith.constant 0 : index
      %39 = vector.load %arg4[%c0_16, %c0_17] : memref<1x1xf32, #tpu.memory_space<vmem>>, vector<1x1xf32>
      tpu.vector_store %arg4[%c0_16, %c0_17], %38 {strides = array<i32>} : memref<1x1xf32, #tpu.memory_space<vmem>>, vector<1x1xf32>,
    } else {
    }
    return
  }
  func.func @transform_0(%arg0: i32, %arg1: i32) -> (i32, i32) {
    %c1_i32 = arith.constant 1 : i32
    %0 = arith.muli %arg0, %c1_i32 : i32
    %1 = arith.addi %0, %arg1 : i32
    %c0_i32 = arith.constant 0 : i32
    %c0_i32_0 = arith.constant 0 : i32
    return %1, %c0_i32 : i32, i32
  }
  func.func @transform_1(%arg0: i32, %arg1: i32) -> (i32, i32) {
    %c1_i32 = arith.constant 1 : i32
    %0 = arith.muli %arg0, %c1_i32 : i32
    %1 = arith.addi %0, %arg1 : i32
    %c0_i32 = arith.constant 0 : i32
    %c0_i32_0 = arith.constant 0 : i32
    return %1, %c0_i32 : i32, i32
  }
  func.func @transform_2(%arg0: i32, %arg1: i32) -> (i32, i32) {
    %c0_i32 = arith.constant 0 : i32
    %c0_i32_0 = arith.constant 0 : i32
    return %arg0, %c0_i32 : i32, i32
  }
}

</mosaic_0001>

<llo_original>
// kernel: tpu_custom_call.1
$region0: #{tpu_custom_call.1}
  #allocation0 [shape = 'u32[]', space=smem, size = 0x4, offset = 0x4, fixed_abs, tag = 'smem constant byte address 0x4 - core index']
  #allocation1 [shape = 'u32[72,128]{1,0:T(1,128)}', space=vmem, size = 0x9000, scoped, tag = 'internal scratch']
  #allocation2 [shape = 'f32[32,128]{1,0:T(8,128)}', space=vmem, size = 0x4000, scoped, tag = 'scratch operand']
  %s0 = inlined_call_operand.hbm [shape: f32[16,128], index: 0, kind: input, shape index: {}]
  %s1 = inlined_call_operand.hbm [shape: f32[16,128], index: 1, kind: input, shape index: {}]
  %s2 = inlined_call_operand.hbm [shape: f32[1,1], index: 2, kind: output, shape index: {}]
  %s3 = sld [smem:[#allocation0]]
  $region42: #{tpu_custom_call.1} parent=0
    _
  %s5 = ssub.s32 1, %s3
  %s6 = scalar_select 0, %s5, %s3
  $region1: #{tpu_custom_call.1} parent=0
    #allocation3 [shape = 'u8[16384]{0}', space=vmem, size = 0x4000, scoped, tag = 'input window, operand 0, single buffered']
    #allocation4 [shape = 's32[1]{0}', space=sflag, size = 0x4, scoped, tag = 'scoped memory for tpu_custom_call.1']
    #allocation5 [shape = 's32[1]{0}', space=sflag, size = 0x4, scoped, tag = 'scoped memory for tpu_custom_call.1']
    #allocation6 [shape = 'u8[16384]{0}', space=vmem, size = 0x4000, scoped, tag = 'input window, operand 1, single buffered']
    #allocation7 [shape = 's32[1]{0}', space=sflag, size = 0x4, scoped, tag = 'scoped memory for tpu_custom_call.1']
    #allocation8 [shape = 'u8[512]{0}', space=vmem, size = 0x400, scoped, tag = 'output window, operand 0, single buffered']
    %7 = vsyncpa [#allocation4], 0
    %8 = vsyncpa [#allocation7], 0
    %9 = vsyncpa [#allocation5], 0
    // Predicated region
    $region2: #{tpu_custom_call.1} parent=1 // pred_check
      _
    $region3: #{tpu_custom_call.1} parent=1 // pred_check_branch
      %11 = sbr.rel (0) target = $region5
    $region4: #{tpu_custom_call.1} parent=1 // pred_region
      %s12 = sadd.s32 0, 0
      %s13 = smul.u32 4, %s12
      %s14 = ssub.s32 2, %s13
      %s15 = smul.u32 8, %s14
      %s16 = ssub.s32 32, %s15
      %s17 = sshll.u32 %s16, 4
      %18 = vsyncadd [#allocation4], %s17
      %p19 = scmp.ne.s32.totalorder 0, %s15
      %s20 = smul.addr %s13, 8
      %s21 = scalar_lea.hbm %s0, %s20
      %s22 = smul.u32 8, %s14
      %s23 = sshll.u32 %s21, 4
      %s24 = int_to_ptr.hbm [resolvable:$true] %s23
      %s25 = sshll.u32 [#allocation3], 4
      %s26 = int_to_ptr.vmem [resolvable:$true] %s25
      %s27 = sshll.u32 %s22, 4
      %31 = dma.hbm_to_vmem [thread:$0]  (%p19), %s24, %s27, %s26, [#allocation4], 128, 128, 8
    $region5: #{tpu_custom_call.1} parent=1 // pred_fallthru
      _
    // Predicated region
    $region6: #{tpu_custom_call.1} parent=1 // pred_check
      _
    $region7: #{tpu_custom_call.1} parent=1 // pred_check_branch
      %33 = sbr.rel (0) target = $region9
    $region8: #{tpu_custom_call.1} parent=1 // pred_region
      %s34 = sadd.s32 0, 0
      %s35 = smul.u32 4, %s34
      %s36 = ssub.s32 2, %s35
      %s37 = smul.u32 8, %s36
      %s38 = ssub.s32 32, %s37
      %s39 = sshll.u32 %s38, 4
      %40 = vsyncadd [#allocation7], %s39
      %p41 = scmp.ne.s32.totalorder 0, %s37
      %s42 = smul.addr %s35, 8
      %s43 = scalar_lea.hbm %s1, %s42
      %s44 = smul.u32 8, %s36
      %s45 = sshll.u32 %s43, 4
      %s46 = int_to_ptr.hbm [resolvable:$true] %s45
      %s47 = sshll.u32 [#allocation6], 4
      %s48 = int_to_ptr.vmem [resolvable:$true] %s47
      %s49 = sshll.u32 %s44, 4
      %53 = dma.hbm_to_vmem [thread:$0]  (%p41), %s46, %s49, %s48, [#allocation7], 128, 128, 8
    $region9: #{tpu_custom_call.1} parent=1 // pred_fallthru
      _
    // Predicated region
    $region10: #{tpu_custom_call.1} parent=1 // pred_check
      _
    $region11: #{tpu_custom_call.1} parent=1 // pred_check_branch
      %55 = sbr.rel (0) target = $region13
    $region12: #{tpu_custom_call.1} parent=1 // pred_region
      %57 = dma.done [#allocation4], 512
    $region13: #{tpu_custom_call.1} parent=1 // pred_fallthru
      _
    // Predicated region
    $region14: #{tpu_custom_call.1} parent=1 // pred_check
      _
    $region15: #{tpu_custom_call.1} parent=1 // pred_check_branch
      %59 = sbr.rel (0) target = $region17
    $region16: #{tpu_custom_call.1} parent=1 // pred_region
      %61 = dma.done [#allocation7], 512
    $region17: #{tpu_custom_call.1} parent=1 // pred_fallthru
      _
    %s62 = sadd.s32 0, 0
    %s63 = smul.u32 4, %s62
    %s64 = ssub.s32 2, %s63
    %s65 = smul.u32 8, %s64
    %s66 = sadd.s32 0, 0
    %s67 = smul.u32 4, %s66
    %s68 = ssub.s32 2, %s67
    %s69 = smul.u32 8, %s68
    %p70 = scmp.eq.s32.totalorder 0, 0
    // Predicated region
    $region18: #{tpu_custom_call.1} parent=1 // pred_check
      %p71 = pneg %p70
    $region19: #{tpu_custom_call.1} parent=1 // pred_check_branch
      %73 = sbr.rel (%p71) target = $region21
    $region20: #{tpu_custom_call.1} parent=1 // pred_region
      %74 = vst [vmem:[#allocation2] sm:$0xff] 0.0
      %75 = vst [vmem:[#allocation2 + $0x8] sm:$0xff] 0.0
      %76 = vst [vmem:[#allocation2 + $0x10] sm:$0xff] 0.0
      %77 = vst [vmem:[#allocation2 + $0x18] sm:$0xff] 0.0
    $region21: #{tpu_custom_call.1} parent=1 // pred_fallthru
      _
    %v78 = vld [vmem:[#allocation3] sm:$0xff]
    %v79 = vld [vmem:[#allocation3 + $0x8] sm:$0xff]
    %v80 = vld [vmem:[#allocation3 + $0x10] sm:$0xff]
    %v81 = vld [vmem:[#allocation3 + $0x18] sm:$0xff]
    %v82 = vld [vmem:[#allocation6] sm:$0xff]
    %v83 = vld [vmem:[#allocation6 + $0x8] sm:$0xff]
    %v84 = vld [vmem:[#allocation6 + $0x10] sm:$0xff]
    %v85 = vld [vmem:[#allocation6 + $0x18] sm:$0xff]
    %v86 = vmul.f32 %v82, 6.0
    %v87 = vmul.f32 %v83, 6.0
    %v88 = vmul.f32 %v84, 6.0
    %v89 = vmul.f32 %v85, 6.0
    %v90 = vmul.f32 %v86, 1.442695
    %v91 = vpow.pop %v90
    %v92 = vmul.f32 %v87, 1.442695
    %v93 = vpow.pop %v92
    %v94 = vmul.f32 %v88, 1.442695
    %v95 = vpow.pop %v94
    %v96 = vmul.f32 %v89, 1.442695
    %v97 = vpow.pop %v96
    %v98 = vsub.f32 %v91, 0.8
    %v99 = vsub.f32 %v93, 0.8
    %v100 = vsub.f32 %v95, 0.8
    %v101 = vsub.f32 %v97, 0.8
    %v102 = vsub.f32 %v78, %v82
    %v103 = vsub.f32 %v79, %v83
    %v104 = vsub.f32 %v80, %v84
    %v105 = vsub.f32 %v81, %v85
    %v106 = vand.u32 2147483647, %v102
    %v107 = vand.u32 2147483647, %v103
    %v108 = vand.u32 2147483647, %v104
    %v109 = vand.u32 2147483647, %v105
    %v110 = vadd.f32 %v106, 1.0
    %v111 = vadd.f32 %v107, 1.0
    %v112 = vadd.f32 %v108, 1.0
    %v113 = vadd.f32 %v109, 1.0
    %v114 = vmul.f32 %v110, %v106
    %v115 = vmul.f32 %v111, %v107
    %v116 = vmul.f32 %v112, %v108
    %v117 = vmul.f32 %v113, %v109
    %v118 = vmul.f32 %v114, %v98
    %v119 = vmul.f32 %v115, %v99
    %v120 = vmul.f32 %v116, %v100
    %v121 = vmul.f32 %v117, %v101
    %s122 = sadd.s32 0, 0
    %s123 = smul.u32 %s122, 32
    %s124 = sadd.s32 %s123, 32
    %p125 = scmp.le.s32.totalorder %s124, 16
    // Predicated region
    $region22: #{tpu_custom_call.1} parent=1 // pred_check
      %p126 = pneg %p125
    $region23: #{tpu_custom_call.1} parent=1 // pred_check_branch
      %128 = sbr.rel (%p126) target = $region25
    $region24: #{tpu_custom_call.1} parent=1 // pred_region
      %v129 = vld [vmem:[#allocation2] sm:$0xff]
      %v130 = vld [vmem:[#allocation2 + $0x8] sm:$0xff]
      %v131 = vld [vmem:[#allocation2 + $0x10] sm:$0xff]
      %v132 = vld [vmem:[#allocation2 + $0x18] sm:$0xff]
      %v133 = vadd.f32 %v118, 0.0
      %v134 = vadd.f32 %v119, 0.0
      %v135 = vadd.f32 %v120, 0.0
      %v136 = vadd.f32 %v121, 0.0
      %v137 = vadd.f32 %v129, %v133
      %v138 = vadd.f32 %v130, %v134
      %v139 = vadd.f32 %v131, %v135
      %v140 = vadd.f32 %v132, %v136
      %141 = vst [vmem:[#allocation2] sm:$0xff] %v137
      %142 = vst [vmem:[#allocation2 + $0x8] sm:$0xff] %v138
      %143 = vst [vmem:[#allocation2 + $0x10] sm:$0xff] %v139
      %144 = vst [vmem:[#allocation2 + $0x18] sm:$0xff] %v140
    $region25: #{tpu_custom_call.1} parent=1 // pred_fallthru
      _
    %p145 = scmp.gt.s32.totalorder %s124, 16
    // Predicated region
    $region26: #{tpu_custom_call.1} parent=1 // pred_check
      %p146 = pneg %p145
    $region27: #{tpu_custom_call.1} parent=1 // pred_check_branch
      %148 = sbr.rel (%p146) target = $region29
    $region28: #{tpu_custom_call.1} parent=1 // pred_region
      %v149 = vlaneseq
      %v150 = vshrl.u32 %v149, 7
      %v151 = vadd.s32 %v150, 8
      %v152 = vadd.s32 %v150, 16
      %v153 = vadd.s32 %v150, 24
      %v154 = vstv %s123
      %v155 = vadd.s32 %v150, %v154
      %v156 = vadd.s32 %v151, %v154
      %v157 = vadd.s32 %v152, %v154
      %v158 = vadd.s32 %v153, %v154
      %v159 = vld [vmem:[#allocation2] sm:$0xff]
      %v160 = vld [vmem:[#allocation2 + $0x8] sm:$0xff]
      %v161 = vld [vmem:[#allocation2 + $0x10] sm:$0xff]
      %v162 = vld [vmem:[#allocation2 + $0x18] sm:$0xff]
      %vm163 = vcmp.lt.s32.totalorder %v155, 16
      %vm164 = vcmp.lt.s32.totalorder %v156, 16
      %vm165 = vcmp.lt.s32.totalorder %v157, 16
      %vm166 = vcmp.lt.s32.totalorder %v158, 16
      %v167 = vsel %vm163, %v118, 0.0
      %v168 = vsel %vm164, %v119, 0.0
      %v169 = vsel %vm165, %v120, 0.0
      %v170 = vsel %vm166, %v121, 0.0
      %v171 = vadd.f32 %v167, 0.0
      %v172 = vadd.f32 %v168, 0.0
      %v173 = vadd.f32 %v169, 0.0
      %v174 = vadd.f32 %v170, 0.0
      %v175 = vadd.f32 %v159, %v171
      %v176 = vadd.f32 %v160, %v172
      %v177 = vadd.f32 %v161, %v173
      %v178 = vadd.f32 %v162, %v174
      %179 = vst [vmem:[#allocation2] sm:$0xff] %v175
      %180 = vst [vmem:[#allocation2 + $0x8] sm:$0xff] %v176
      %181 = vst [vmem:[#allocation2 + $0x10] sm:$0xff] %v177
      %182 = vst [vmem:[#allocation2 + $0x18] sm:$0xff] %v178
    $region29: #{tpu_custom_call.1} parent=1 // pred_fallthru
      _
    // Predicated region
    $region30: #{tpu_custom_call.1} parent=1 // pred_check
      %p183 = pneg %p70
    $region31: #{tpu_custom_call.1} parent=1 // pred_check_branch
      %185 = sbr.rel (%p183) target = $region33
    $region32: #{tpu_custom_call.1} parent=1 // pred_region
      %v186 = vld [vmem:[#allocation2] sm:$0xff]
      %v187 = vld [vmem:[#allocation2 + $0x8] sm:$0xff]
      %v188 = vld [vmem:[#allocation2 + $0x10] sm:$0xff]
      %v189 = vld [vmem:[#allocation2 + $0x18] sm:$0xff]
      %v190 = vadd.f32 %v186, %v187
      %v191 = vadd.f32 %v190, %v188
      %v192 = vadd.f32 %v191, %v189
      %193 = vadd.xlane.f32.xlu0 %v192
      %v194 = vpop.xlane.xlu0 %193
      %v195 = vrot.slane %v194, 4
      %v196 = vadd.f32 %v194, %v195
      %v197 = vrot.slane %v196, 2
      %v198 = vadd.f32 %v196, %v197
      %v199 = vrot.slane %v198, 1
      %v200 = vadd.f32 %v198, %v199
      %s201 = vtos %v200
      %v202 = vstv %s201
      %v203 = vmul.f32 %v202, 0.00048828125
      %vm204 = vcmask 0
      %205 = vst.msk [vmem:[#allocation8] sm:$0x1] %vm204, %v203
    $region33: #{tpu_custom_call.1} parent=1 // pred_fallthru
      _
    // Predicated region
    $region34: #{tpu_custom_call.1} parent=1 // pred_check
      _
    $region35: #{tpu_custom_call.1} parent=1 // pred_check_branch
      %207 = sbr.rel (0) target = $region37
    $region36: #{tpu_custom_call.1} parent=1 // pred_region
      %209 = vsyncadd [#allocation5], 0
      %s211 = sshll.u32 [#allocation8], 4
      %s212 = int_to_ptr.vmem [resolvable:$true] %s211
      %s213 = sshll.u32 %s2, 4
      %s214 = int_to_ptr.hbm [resolvable:$true] %s213
      %216 = dma.vmem_to_hbm [thread:$0]  %s212, 16, %s214, [#allocation5]
    $region37: #{tpu_custom_call.1} parent=1 // pred_fallthru
      _
    // Predicated region
    $region38: #{tpu_custom_call.1} parent=1 // pred_check
      _
    $region39: #{tpu_custom_call.1} parent=1 // pred_check_branch
      %218 = sbr.rel (0) target = $region41
    $region40: #{tpu_custom_call.1} parent=1 // pred_region
      %220 = dma.done [#allocation5], 16
    $region41: #{tpu_custom_call.1} parent=1 // pred_fallthru
      _
    %221 = vsyncpa [#allocation4], 1
    %222 = vsyncpa [#allocation7], 1
    %223 = vsyncpa [#allocation5], 1

</llo_original>
